<compile_context>
chip_gen: v7x
topology: tpu7x:2x2x1
jax: 0.10.0
libtpu: 0.0.40
codegen_flags: <defaults>
</compile_context>

<pallas_src>
import functools

import jax
import jax.numpy as jnp
from jax.experimental import pallas as pl
from jax.experimental.pallas import tpu as pltpu


# --------------------- tiled matmul (qkv_proj / o_proj) ---------------------

def _matmul_kernel_single(a_ref, b_ref, o_ref):
    # bf16 MXU inputs, f32 accumulation, single K step (no scratch accumulator).
    o_ref[...] = jnp.dot(a_ref[...].astype(jnp.bfloat16),
                         b_ref[...].astype(jnp.bfloat16),
                         preferred_element_type=jnp.float32).astype(o_ref.dtype)


def _matmul_kernel_acc(a_ref, b_ref, o_ref, acc_ref):
    @pl.when(pl.program_id(2) == 0)
    def _():
        acc_ref[...] = jnp.zeros(acc_ref.shape, acc_ref.dtype)

    acc_ref[...] += jnp.dot(a_ref[...].astype(jnp.bfloat16),
                            b_ref[...].astype(jnp.bfloat16),
                            preferred_element_type=jnp.float32)

    @pl.when(pl.program_id(2) == pl.num_programs(2) - 1)
    def _():
        o_ref[...] = acc_ref[...].astype(o_ref.dtype)


def matmul(a, b, *, tm=256, tn=256, tk=512, out_dtype=None):
    m, k = a.shape
    k2, n = b.shape
    assert k == k2
    out_dtype = a.dtype if out_dtype is None else out_dtype
    tm, tn = min(tm, m), min(tn, n)
    assert m % tm == 0 and n % tn == 0

    if k <= tk:
        # K fits a single tile: drop the K grid axis and the accumulator scratch.
        return pl.pallas_call(
            _matmul_kernel_single,
            grid=(m // tm, n // tn),
            in_specs=[pl.BlockSpec((tm, k), lambda i, j: (i, 0)),
                      pl.BlockSpec((k, tn), lambda i, j: (0, j))],
            out_specs=pl.BlockSpec((tm, tn), lambda i, j: (i, j)),
            out_shape=jax.ShapeDtypeStruct((m, n), out_dtype),
            compiler_params=pltpu.CompilerParams(
                dimension_semantics=("parallel", "parallel")),
        )(a, b)

    assert k % tk == 0
    return pl.pallas_call(
        _matmul_kernel_acc,
        grid=(m // tm, n // tn, k // tk),
        in_specs=[pl.BlockSpec((tm, tk), lambda i, j, kk: (i, kk)),
                  pl.BlockSpec((tk, tn), lambda i, j, kk: (kk, j))],
        out_specs=pl.BlockSpec((tm, tn), lambda i, j, kk: (i, j)),
        out_shape=jax.ShapeDtypeStruct((m, n), out_dtype),
        scratch_shapes=[pltpu.VMEM((tm, tn), jnp.float32)],
        compiler_params=pltpu.CompilerParams(
            dimension_semantics=("parallel", "parallel", "arbitrary")),
    )(a, b)


# -------------- RoPE pre-rotation pass over the Q / K slabs of qkv --------------

def _rope_kernel(x_ref, cos_ref, sin_ref, o_ref, *, half, scale, n_q_heads):
    # neox-style rotation: [x1*cos - x2*sin, x2*cos + x1*sin]
    x = x_ref[...].astype(jnp.float32)
    x1 = x[:, :half]
    x2 = x[:, half:]
    cos = cos_ref[...]
    sin = sin_ref[...]
    # Fold the softmax scale into Q heads only (K heads get scale 1.0).
    sc = jnp.where(pl.program_id(0) < n_q_heads,
                   jnp.float32(scale), jnp.float32(1.0))
    o1 = (x1 * cos - x2 * sin) * sc
    o2 = (x2 * cos + x1 * sin) * sc
    o_ref[...] = jnp.concatenate([o1, o2], axis=-1).astype(o_ref.dtype)


def apply_rope(qkv, cos, sin, *, num_heads, num_kv_heads, head_dim, scale, tt=256):
    """Rotate (and pre-scale) the Q and K column slabs of qkv -> [T, (n_h+n_kv)*d] bf16."""
    t = qkv.shape[0]
    d = head_dim
    half = d // 2
    n_rot = num_heads + num_kv_heads
    tt = min(tt, t)
    assert t % tt == 0
    return pl.pallas_call(
        functools.partial(_rope_kernel, half=half, scale=scale, n_q_heads=num_heads),
        grid=(n_rot, t // tt),
        in_specs=[pl.BlockSpec((tt, d), lambda h, ti: (ti, h)),
                  pl.BlockSpec((tt, half), lambda h, ti: (ti, 0)),
                  pl.BlockSpec((tt, half), lambda h, ti: (ti, 0))],
        out_specs=pl.BlockSpec((tt, d), lambda h, ti: (ti, h)),
        out_shape=jax.ShapeDtypeStruct((t, n_rot * d), jnp.bfloat16),
        compiler_params=pltpu.CompilerParams(
            dimension_semantics=("parallel", "parallel")),
    )(qkv, cos, sin)


# ---------------- flash attention: causal, online softmax, GQA ----------------

def _flash_attn_kernel(q_ref, k_ref, v_ref, o_ref, m_ref, l_ref, acc_ref, *, tq, tkv):
    qi = pl.program_id(1)
    ki = pl.program_id(2)

    @pl.when(ki == 0)
    def _():
        m_ref[...] = jnp.full(m_ref.shape, -jnp.inf, m_ref.dtype)
        l_ref[...] = jnp.zeros(l_ref.shape, l_ref.dtype)
        acc_ref[...] = jnp.zeros(acc_ref.shape, acc_ref.dtype)

    q_first = qi * tq
    q_last = q_first + tq - 1
    kv_first = ki * tkv
    kv_last = kv_first + tkv - 1

    def qk():
        # Q is pre-rotated and pre-scaled; contract last dims (no transpose).
        return jax.lax.dot_general(q_ref[...], k_ref[...],
                                   (((1,), (1,)), ((), ())),
                                   preferred_element_type=jnp.float32)

    def online_update(s):
        m_prev = m_ref[...]
        m_new = jnp.maximum(m_prev, jnp.max(s, axis=-1, keepdims=True))
        alpha = jnp.exp(m_prev - m_new)
        p = jnp.exp(s - m_new)
        l_ref[...] = alpha * l_ref[...] + jnp.sum(p, axis=-1, keepdims=True)
        acc_ref[...] = alpha * acc_ref[...] + jnp.dot(
            p.astype(v_ref.dtype), v_ref[...], preferred_element_type=jnp.float32)
        m_ref[...] = m_new

    # Strictly-below-diagonal tiles: no mask construction needed.
    @pl.when(kv_last <= q_first)
    def _():
        online_update(qk())

    # Diagonal-straddling tiles that are still causally reachable: apply mask.
    @pl.when(jnp.logical_and(kv_first <= q_last, kv_last > q_first))
    def _():
        s = qk()
        row = q_first + jax.lax.broadcasted_iota(jnp.int32, (tq, tkv), 0)
        col = kv_first + jax.lax.broadcasted_iota(jnp.int32, (tq, tkv), 1)
        s = jnp.where(col <= row, s, jnp.float32(-1e30))
        online_update(s)

    @pl.when(ki == pl.num_programs(2) - 1)
    def _():
        # Exact divide in the (once-per-tile) finalize.
        o_ref[...] = (acc_ref[...] / l_ref[...]).astype(o_ref.dtype)


def flash_attention(qk_rot, qkv, *, num_heads, num_kv_heads, head_dim, tq=256, tkv=256):
    t = qkv.shape[0]
    d = head_dim
    n_h, n_kv = num_heads, num_kv_heads
    rep = n_h // n_kv
    assert d % 128 == 0, "head_dim must be a multiple of 128 lanes"
    tq, tkv = min(tq, t), min(tkv, t)
    assert t % tq == 0 and t % tkv == 0
    grid = (n_h, t // tq, t // tkv)

    # Clamp the KV block index so causally-skipped steps re-use the previous block
    # and issue no new DMA.
    def kv_block(qi, ki):
        return jnp.minimum(ki, ((qi + 1) * tq - 1) // tkv)

    q_spec = pl.BlockSpec((tq, d), lambda h, qi, ki: (qi, h))
    k_spec = pl.BlockSpec((tkv, d),
                          lambda h, qi, ki: (kv_block(qi, ki), n_h + h // rep))
    v_spec = pl.BlockSpec((tkv, d),
                          lambda h, qi, ki: (kv_block(qi, ki), n_h + n_kv + h // rep))
    out_spec = pl.BlockSpec((tq, d), lambda h, qi, ki: (qi, h))

    return pl.pallas_call(
        functools.partial(_flash_attn_kernel, tq=tq, tkv=tkv),
        grid=grid,
        in_specs=[q_spec, k_spec, v_spec],
        out_specs=out_spec,
        out_shape=jax.ShapeDtypeStruct((t, n_h * d), jnp.bfloat16),
        scratch_shapes=[pltpu.VMEM((tq, 1), jnp.float32),    # running max
                        pltpu.VMEM((tq, 1), jnp.float32),    # running sum
                        pltpu.VMEM((tq, d), jnp.float32)],   # output accumulator
        compiler_params=pltpu.CompilerParams(
            dimension_semantics=("parallel", "parallel", "arbitrary")),
    )(qk_rot, qk_rot, qkv)


# ----------------------------- glue (plain JAX) -----------------------------

def rope_tables(positions, head_dim, theta):
    """Precompute [T, D/2] cos / sin tables for the neox rotation."""
    half = head_dim // 2
    inv_freq = 1.0 / (theta ** (jnp.arange(half, dtype=jnp.float32) * 2.0 / head_dim))
    freqs = positions.astype(jnp.float32)[:, None] * inv_freq[None, :]    # [T, half]
    return jnp.cos(freqs), jnp.sin(freqs)


def hat_attention_forward(params, cfg, positions, hidden_states):
    n_h = cfg["num_heads"]
    n_kv = cfg["num_kv_heads"]
    d = cfg["head_dim"]
    scale = d ** -0.5
    # qkv_proj (bf16 activation to halve attention-side HBM traffic, f32 accumulation)
    qkv = matmul(hidden_states, params["qkv_w"], out_dtype=jnp.bfloat16)  # [T,(n_h+2n_kv)*d]
    cos, sin = rope_tables(positions, d, cfg["rope_theta"])
    # one-shot RoPE over Q/K slabs; Q pre-scaled by the softmax scale
    qk_rot = apply_rope(qkv, cos, sin, num_heads=n_h, num_kv_heads=n_kv,
                        head_dim=d, scale=scale)                          # [T,(n_h+n_kv)*d]
    attn_out = flash_attention(qk_rot, qkv, num_heads=n_h, num_kv_heads=n_kv,
                               head_dim=d)                                # [T, n_h*d]
    return matmul(attn_out, params["o_w"], out_dtype=jnp.float32)         # [T, H]


# ----------------------------- reference (pure JAX) -----------------------------

def _apply_rope_neox_ref(positions, q, k, head_dim, theta):
    half = head_dim // 2
    inv_freq = 1.0 / (theta ** (jnp.arange(half, dtype=jnp.float32) * 2.0 / head_dim))
    freqs = positions.astype(jnp.float32)[:, None] * inv_freq[None, :]
    cos = jnp.cos(freqs)[:, None, :]
    sin = jnp.sin(freqs)[:, None, :]

    def rot(x):
        x1, x2 = x[..., :half], x[..., half:]
        return jnp.concatenate([x1 * cos - x2 * sin, x2 * cos + x1 * sin], axis=-1)

    return rot(q), rot(k)


def ref_forward(params, cfg, positions, hidden_states):
    n_h = cfg["num_heads"]
    n_kv = cfg["num_kv_heads"]
    d = cfg["head_dim"]
    scale = d ** -0.5
    q_size = n_h * d
    kv_size = n_kv * d
    t = hidden_states.shape[0]

    qkv = hidden_states @ params["qkv_w"]
    q = qkv[:, :q_size].reshape(t, n_h, d)
    k = qkv[:, q_size:q_size + kv_size].reshape(t, n_kv, d)
    v = qkv[:, q_size + kv_size:].reshape(t, n_kv, d)
    q, k = _apply_rope_neox_ref(positions, q, k, d, cfg["rope_theta"])
    rep = n_h // n_kv
    k = jnp.repeat(k, rep, axis=1)
    v = jnp.repeat(v, rep, axis=1)
    s = jnp.einsum("thd,shd->hts", q, k) * scale
    mask = jnp.tril(jnp.ones((t, t), dtype=bool))
    s = jnp.where(mask[None], s, -jnp.inf)
    p = jax.nn.softmax(s, axis=-1)
    o = jnp.einsum("hts,shd->thd", p, v).reshape(t, n_h * d)
    return o @ params["o_w"]


# ----------------------------- main -----------------------------

if __name__ == "__main__":
    cfg = dict(
        hidden_size=512,
        num_heads=4,
        num_kv_heads=2,
        head_dim=128,       # hidden_size // num_heads, lane-aligned
        rope_theta=10000.0,
    )
    T = 512                 # exercises causal tile skipping + masked/unmasked paths

    key = jax.random.PRNGKey(0)
    k1, k2, k3 = jax.random.split(key, 3)
    h = cfg["hidden_size"]
    n_h, n_kv, d = cfg["num_heads"], cfg["num_kv_heads"], cfg["head_dim"]
    params = {
        # weights stored [in, out] so kernels compute x @ W
        "qkv_w": 0.02 * jax.random.normal(k1, (h, (n_h + 2 * n_kv) * d), jnp.float32),
        "o_w": 0.02 * jax.random.normal(k2, (n_h * d, h), jnp.float32),
    }
    positions = jnp.arange(T, dtype=jnp.int32)
    hidden_states = jax.random.normal(k3, (T, h), jnp.float32)

    out = hat_attention_forward(params, cfg, positions, hidden_states)
    out = jax.block_until_ready(out)

    ref = ref_forward(params, cfg, positions, hidden_states)
    assert out.shape == (T, h)
    assert bool(jnp.all(jnp.isfinite(out)))
    max_diff = float(jnp.max(jnp.abs(out - ref)))
    assert jnp.allclose(out, ref, rtol=2e-2, atol=2e-2), f"max abs diff {max_diff}"
    print("KERNEL_OK")
</pallas_src>

<mosaic_0001>
module attributes {stable_mosaic.version = 11 : i64} {
  func.func @_matmul_kernel_single(%arg0: i32, %arg1: i32, %arg2: memref<256x512xf32, #tpu.memory_space<vmem>>, %arg3: memref<512x256xf32, #tpu.memory_space<vmem>>, %arg4: memref<256x256xbf16, #tpu.memory_space<vmem>>) attributes {dimension_semantics = [#tpu.dimension_semantics<parallel>, #tpu.dimension_semantics<parallel>], iteration_bounds = array<i64: 2, 4>, scalar_prefetch = 0 : i64, scratch_operands = 0 : i64, tpu.core_type = #tpu.core_type<tc>, window_params = [{transform_indices = @transform_0, window_bounds = array<i64: 256, 512>}, {transform_indices = @transform_1, window_bounds = array<i64: 512, 256>}, {transform_indices = @transform_2, window_bounds = array<i64: 256, 256>}]} {
    %c0 = arith.constant 0 : index
    %c0_0 = arith.constant 0 : index
    %0 = vector.load %arg2[%c0, %c0_0] : memref<256x512xf32, #tpu.memory_space<vmem>>, vector<256x512xf32>
    %1 = arith.truncf %0 : vector<256x512xf32> to vector<256x512xbf16>
    %c0_1 = arith.constant 0 : index
    %c0_2 = arith.constant 0 : index
    %2 = vector.load %arg3[%c0_1, %c0_2] : memref<512x256xf32, #tpu.memory_space<vmem>>, vector<512x256xf32>
    %3 = arith.truncf %2 : vector<512x256xf32> to vector<512x256xbf16>
    %cst = arith.constant dense<0.000000e+00> : vector<256x256xf32>
    %4 = tpu.matmul %1, %3, %cst {dimension_numbers = #tpu.dot_dimension_numbers<[1], [0], [0], [1], [0, 0, 1, 1], [], []>} : vector<256x512xbf16>, vector<512x256xbf16>, vector<256x256xf32> -> vector<256x256xf32>
    %5 = arith.truncf %4 : vector<256x256xf32> to vector<256x256xbf16>
    %c0_3 = arith.constant 0 : index
    %c0_4 = arith.constant 0 : index
    %6 = vector.load %arg4[%c0_3, %c0_4] : memref<256x256xbf16, #tpu.memory_space<vmem>>, vector<256x256xbf16>
    tpu.vector_store %arg4[%c0_3, %c0_4], %5 {strides = array<i32>} : memref<256x256xbf16, #tpu.memory_space<vmem>>, vector<256x256xbf16>,
    return
  }
  func.func @transform_0(%arg0: i32, %arg1: i32) -> (i32, i32) {
    %c0_i32 = arith.constant 0 : i32
    %c0_i32_0 = arith.constant 0 : i32
    return %arg0, %c0_i32 : i32, i32
  }
  func.func @transform_1(%arg0: i32, %arg1: i32) -> (i32, i32) {
    %c0_i32 = arith.constant 0 : i32
    %c0_i32_0 = arith.constant 0 : i32
    return %c0_i32, %arg1 : i32, i32
  }
  func.func @transform_2(%arg0: i32, %arg1: i32) -> (i32, i32) {
    %c0_i32 = arith.constant 0 : i32
    return %arg0, %arg1 : i32, i32
  }
}

</mosaic_0001>

<llo_original>
// kernel: tpu_custom_call.1
$region0: #{tpu_custom_call.1}
  #allocation0 [shape = 'u32[]', space=smem, size = 0x4, offset = 0x4, fixed_abs, tag = 'smem constant byte address 0x4 - core index']
  #allocation1 [shape = 'u32[144,128]{1,0:T(1,128)}', space=vmem, size = 0x12000, scoped, tag = 'internal scratch']
  %s0 = inlined_call_operand.hbm [shape: f32[512,512], index: 0, kind: input, shape index: {}]
  %s1 = inlined_call_operand.hbm [shape: f32[512,1024], index: 1, kind: input, shape index: {}]
  %s2 = inlined_call_operand.hbm [shape: bf16[512,1024], index: 2, kind: output, shape index: {}]
  %s3 = sld [smem:[#allocation0]]
  $region49: #{tpu_custom_call.1} parent=0
    _
  %s5 = ssub.s32 1, %s3
  %s6 = scalar_select 0, %s5, %s3
  $region1: #{tpu_custom_call.1} parent=0
    #allocation2 [shape = 'u8[1048576]{0}', space=vmem, size = 0x100000, scoped, tag = 'input window, operand 0']
    #allocation3 [shape = 's32[2]{0}', space=sflag, size = 0x8, scoped, tag = 'scoped memory for tpu_custom_call.1']
    #allocation4 [shape = 's32[2]{0}', space=sflag, size = 0x8, scoped, tag = 'scoped memory for tpu_custom_call.1']
    #allocation5 [shape = 'u8[1048576]{0}', space=vmem, size = 0x100000, scoped, tag = 'input window, operand 1']
    #allocation6 [shape = 's32[2]{0}', space=sflag, size = 0x8, scoped, tag = 'scoped memory for tpu_custom_call.1']
    #allocation7 [shape = 'u8[262144]{0}', space=vmem, size = 0x40000, scoped, tag = 'output window, operand 0']
    %7 = vsyncpa [#allocation3], 0
    %s8 = scalar_lea.sflag [#allocation3], 1
    %9 = vsyncpa %s8, 0
    %10 = vsyncpa [#allocation6], 0
    %s11 = scalar_lea.sflag [#allocation6], 1
    %12 = vsyncpa %s11, 0
    %13 = vsyncpa [#allocation4], 0
    %s14 = scalar_lea.sflag [#allocation4], 1
    %15 = vsyncpa %s14, 0
    loop: start=0, step=1, limit=10
    $region2: #{tpu_custom_call.1} parent=1 // loop_pre_header
      _
    $region3: #{tpu_custom_call.1} parent=1 // loop_header
      %s17 = sphi 0, %s21
      %p18 = scmp.ge.s32.totalorder %s17, 10
      %s24 = sphi 0, %s36
      %s25 = sphi 0, %s32
      %s26 = sphi 0, %s24
      %s27 = sphi 0, %s25
      %s28 = sphi 0, %s26
      %s29 = sphi 0, %s27
      %s39 = sphi 0, %s41
      %s42 = sphi 0, %s39
      %s43 = sphi 0, %s42
      %s59 = sphi 0, %s43
      %s65 = sphi 0, %s67
      %s68 = sphi 0, %s65
      %s69 = sphi 0, %s68
      %s85 = sphi 0, %s69
      %s93 = sphi 0, %s95
      %s96 = sphi 0, %s93
      %s97 = sphi 0, %s96
      %s113 = sphi 0, %s97
    $region4: #{tpu_custom_call.1} parent=1 // loop_header_branch
      %20 = sbr.rel (%p18) target = $region8
    $region5: #{tpu_custom_call.1} parent=1 // loop_body
      %s22 = ssub.s32 %s17, 1
      %s23 = ssub.s32 %s17, 2
      %s30 = sadd.s32 1, %s25
      %p31 = scmp.ge.s32.totalorder %s30, 4
      %s32 = scalar_select %p31, 0, %s30
      %s33 = sadd.s32 1, %s24
      %s34 = scalar_select %p31, %s33, %s24
      %p35 = scmp.ge.s32.totalorder %s34, 2
      %s36 = scalar_select %p35, 0, %s34
      %s37 = ssub.s32 %s24, %s36
      %p38 = scmp.eq.s32.totalorder %s37, 0
      %s40 = sadd.s32 %s39, 1
      %s41 = scalar_select %p38, %s39, %s40
      %p44 = pneg %p38
      %p45 = scmp.eq.s32.totalorder %s17, 7
      %p46 = por %p44, %p45
      %p47 = scmp.ne.s32.totalorder %s39, %s42
      %p48 = scmp.eq.s32.totalorder %s17, 0
      %p49 = por %p47, %p48
      %p50 = scmp.ne.s32.totalorder %s39, %s42
      %p51 = scmp.eq.s32.totalorder %s22, 7
      %p52 = por %p50, %p51
      %p53 = scmp.ne.s32.totalorder %s42, %s43
      %p54 = scmp.eq.s32.totalorder %s22, 0
      %p55 = por %p53, %p54
      %p56 = scmp.ne.s32.totalorder %s42, %s43
      %p57 = scmp.eq.s32.totalorder %s23, 7
      %p58 = por %p56, %p57
      %p60 = scmp.ne.s32.totalorder %s43, %s59
      %p61 = scmp.eq.s32.totalorder %s23, 0
      %p62 = por %p60, %p61
      %s63 = ssub.s32 %s25, %s32
      %p64 = scmp.eq.s32.totalorder %s63, 0
      %s66 = sadd.s32 %s65, 1
      %s67 = scalar_select %p64, %s65, %s66
      %p70 = pneg %p64
      %p71 = scmp.eq.s32.totalorder %s17, 7
      %p72 = por %p70, %p71
      %p73 = scmp.ne.s32.totalorder %s65, %s68
      %p74 = scmp.eq.s32.totalorder %s17, 0
      %p75 = por %p73, %p74
      %p76 = scmp.ne.s32.totalorder %s65, %s68
      %p77 = scmp.eq.s32.totalorder %s22, 7
      %p78 = por %p76, %p77
      %p79 = scmp.ne.s32.totalorder %s68, %s69
      %p80 = scmp.eq.s32.totalorder %s22, 0
      %p81 = por %p79, %p80
      %p82 = scmp.ne.s32.totalorder %s68, %s69
      %p83 = scmp.eq.s32.totalorder %s23, 7
      %p84 = por %p82, %p83
      %p86 = scmp.ne.s32.totalorder %s69, %s85
      %p87 = scmp.eq.s32.totalorder %s23, 0
      %p88 = por %p86, %p87
      %s89 = ssub.s32 %s24, %s36
      %s90 = ssub.s32 %s25, %s32
      %s91 = sor.u32 %s89, %s90
      %p92 = scmp.eq.s32.totalorder %s91, 0
      %s94 = sadd.s32 %s93, 1
      %s95 = scalar_select %p92, %s93, %s94
      %p98 = pneg %p92
      %p99 = scmp.eq.s32.totalorder %s17, 7
      %p100 = por %p98, %p99
      %p101 = scmp.ne.s32.totalorder %s93, %s96
      %p102 = scmp.eq.s32.totalorder %s17, 0
      %p103 = por %p101, %p102
      %p104 = scmp.ne.s32.totalorder %s93, %s96
      %p105 = scmp.eq.s32.totalorder %s22, 7
      %p106 = por %p104, %p105
      %p107 = scmp.ne.s32.totalorder %s96, %s97
      %p108 = scmp.eq.s32.totalorder %s22, 0
      %p109 = por %p107, %p108
      %p110 = scmp.ne.s32.totalorder %s96, %s97
      %p111 = scmp.eq.s32.totalorder %s23, 7
      %p112 = por %p110, %p111
      %p114 = scmp.ne.s32.totalorder %s97, %s113
      %p115 = scmp.eq.s32.totalorder %s23, 0
      %p116 = por %p114, %p115
      %p117 = scmp.le.s32.totalorder 1, %s17
      %p118 = scmp.lt.s32.totalorder %s17, 9
      %p119 = pnand %p117, %p118
      %p120 = pneg %p119
      // Predicated region
      $region9: #{tpu_custom_call.1} parent=5 // pred_check
        _
      $region10: #{tpu_custom_call.1} parent=5 // pred_check_branch
        %122 = sbr.rel (%p119) target = $region12
      $region11: #{tpu_custom_call.1} parent=5 // pred_region
        %s123 = ssub.s32 %s17, 1
      $region12: #{tpu_custom_call.1} parent=5 // pred_fallthru
        _
      %p124 = scmp.lt.s32.totalorder %s17, 8
      // Predicated region
      $region13: #{tpu_custom_call.1} parent=5 // pred_check
        %p125 = pneg %p124
      $region14: #{tpu_custom_call.1} parent=5 // pred_check_branch
        %127 = sbr.rel (%p125) target = $region16
      $region15: #{tpu_custom_call.1} parent=5 // pred_region
        // Predicated region
        $region17: #{tpu_custom_call.1} parent=15 // pred_check
          %p128 = pneg %p49
        $region18: #{tpu_custom_call.1} parent=15 // pred_check_branch
          %130 = sbr.rel (%p128) target = $region20
        $region19: #{tpu_custom_call.1} parent=15 // pred_region
          %s131 = sand.u32 %s39, 1
          %s132 = scalar_lea.sflag [#allocation3], %s131
          %s133 = sand.u32 %s39, 1
          %s134 = smul.addr %s133, 1024
          %s135 = scalar_lea.vmem [#allocation2], %s134
          %s136 = smul.u32 32, %s24
          %s138 = ssub.s32 16384, 16384
          %139 = vsyncadd %s132, %s138
          %s140 = smul.addr %s136, 4
          %s141 = smul.addr %s140, 128
          %s142 = scalar_lea.hbm %s0, %s141
          %s143 = sshll.u32 %s135, 4
          %s144 = int_to_ptr.vmem [resolvable:$true] %s143
          %149 = dma.hbm_to_vmem [thread:$0]  %s142, 16384, %s144, %s132, 512, 512, 32
        $region20: #{tpu_custom_call.1} parent=15 // pred_fallthru
          _
        // Predicated region
        $region21: #{tpu_custom_call.1} parent=15 // pred_check
          %p150 = pneg %p75
        $region22: #{tpu_custom_call.1} parent=15 // pred_check_branch
          %152 = sbr.rel (%p150) target = $region24
        $region23: #{tpu_custom_call.1} parent=15 // pred_region
          %s153 = sand.u32 %s65, 1
          %s154 = scalar_lea.sflag [#allocation6], %s153
          %s155 = sand.u32 %s65, 1
          %s156 = smul.addr %s155, 1024
          %s157 = scalar_lea.vmem [#allocation5], %s156
          %s158 = smul.u32 2, %s25
          %s160 = ssub.s32 16384, 16384
          %161 = vsyncadd %s154, %s160
          %s162 = smul.addr %s158, 128
          %s163 = scalar_lea.hbm %s1, %s162
          %s164 = sshll.u32 %s157, 4
          %s165 = int_to_ptr.vmem [resolvable:$true] %s164
          %170 = dma.hbm_to_vmem [thread:$0]  %s163, 16384, %s165, %s154, 1024, 256, 16
        $region24: #{tpu_custom_call.1} parent=15 // pred_fallthru
          _
      $region16: #{tpu_custom_call.1} parent=5 // pred_fallthru
        _
      %p171 = scmp.le.s32.totalorder 1, %s17
      %p172 = scmp.lt.s32.totalorder %s17, 9
      %p173 = pnand %p171, %p172
      %p174 = pneg %p173
      // Predicated region
      $region25: #{tpu_custom_call.1} parent=5 // pred_check
        _
      $region26: #{tpu_custom_call.1} parent=5 // pred_check_branch
        %176 = sbr.rel (%p173) target = $region28
      $region27: #{tpu_custom_call.1} parent=5 // pred_region
        %s177 = ssub.s32 %s17, 1
        %s178 = sand.u32 %s42, 1
        %s179 = scalar_lea.sflag [#allocation3], %s178
        %s180 = sand.u32 %s42, 1
        %s181 = smul.addr %s180, 1024
        %s182 = scalar_lea.vmem [#allocation2], %s181
        // Predicated region
        $region29: #{tpu_custom_call.1} parent=27 // pred_check
          %p183 = pneg %p55
        $region30: #{tpu_custom_call.1} parent=27 // pred_check_branch
          %185 = sbr.rel (%p183) target = $region32
        $region31: #{tpu_custom_call.1} parent=27 // pred_region
          %186 = dma.done %s179, 16384
        $region32: #{tpu_custom_call.1} parent=27 // pred_fallthru
          _
        %s187 = sand.u32 %s68, 1
        %s188 = scalar_lea.sflag [#allocation6], %s187
        %s189 = sand.u32 %s68, 1
        %s190 = smul.addr %s189, 1024
        %s191 = scalar_lea.vmem [#allocation5], %s190
        // Predicated region
        $region33: #{tpu_custom_call.1} parent=27 // pred_check
          %p192 = pneg %p81
        $region34: #{tpu_custom_call.1} parent=27 // pred_check_branch
          %194 = sbr.rel (%p192) target = $region36
        $region35: #{tpu_custom_call.1} parent=27 // pred_region
          %195 = dma.done %s188, 16384
        $region36: #{tpu_custom_call.1} parent=27 // pred_fallthru
          _
        %s196 = sand.u32 %s42, 1
        %s197 = scalar_lea.sflag [#allocation3], %s196
        %s198 = sand.u32 %s42, 1
        %s199 = smul.addr %s198, 1024
        %s200 = scalar_lea.vmem [#allocation2], %s199
        %p201 = pneg %p55
        %p202 = pneg %p52
        %s203 = sand.u32 %s68, 1
        %s204 = scalar_lea.sflag [#allocation6], %s203
        %s205 = sand.u32 %s68, 1
        %s206 = smul.addr %s205, 1024
        %s207 = scalar_lea.vmem [#allocation5], %s206
        %p208 = pneg %p81
        %p209 = pneg %p78
        %p210 = pneg %p109
        %p211 = pneg %p106
        %s212 = sand.u32 %s96, 1
        %s213 = scalar_lea.sflag [#allocation4], %s212
        %s214 = sand.u32 %s96, 1
        %s215 = smul.addr %s214, 256
        %s216 = scalar_lea.vmem [#allocation7], %s215
        %s217 = smul.u32 32, %s26
        %s218 = smul.u32 2, %s27
        %s219 = smul.u32 32, %s26
        %s220 = smul.u32 2, %s27
        %v221 = vld [vmem:[%s182] sm:$0xff]
        %v222 = vld [vmem:[%s182 + $0x8] sm:$0xff]
        %v223 = vld [vmem:[%s182 + $0x10] sm:$0xff]
        %v224 = vld [vmem:[%s182 + $0x18] sm:$0xff]
        %v225 = vld [vmem:[%s182 + $0x20] sm:$0xff]
        %v226 = vld [vmem:[%s182 + $0x28] sm:$0xff]
        %v227 = vld [vmem:[%s182 + $0x30] sm:$0xff]
        %v228 = vld [vmem:[%s182 + $0x38] sm:$0xff]
        %v229 = vld [vmem:[%s182 + $0x40] sm:$0xff]
        %v230 = vld [vmem:[%s182 + $0x48] sm:$0xff]
        %v231 = vld [vmem:[%s182 + $0x50] sm:$0xff]
        %v232 = vld [vmem:[%s182 + $0x58] sm:$0xff]
        %v233 = vld [vmem:[%s182 + $0x60] sm:$0xff]
        %v234 = vld [vmem:[%s182 + $0x68] sm:$0xff]
        %v235 = vld [vmem:[%s182 + $0x70] sm:$0xff]
        %v236 = vld [vmem:[%s182 + $0x78] sm:$0xff]
        %v237 = vld [vmem:[%s182 + $0x80] sm:$0xff]
        %v238 = vld [vmem:[%s182 + $0x88] sm:$0xff]
        %v239 = vld [vmem:[%s182 + $0x90] sm:$0xff]
        %v240 = vld [vmem:[%s182 + $0x98] sm:$0xff]
        %v241 = vld [vmem:[%s182 + $0xa0] sm:$0xff]
        %v242 = vld [vmem:[%s182 + $0xa8] sm:$0xff]
        %v243 = vld [vmem:[%s182 + $0xb0] sm:$0xff]
        %v244 = vld [vmem:[%s182 + $0xb8] sm:$0xff]
        %v245 = vld [vmem:[%s182 + $0xc0] sm:$0xff]
        %v246 = vld [vmem:[%s182 + $0xc8] sm:$0xff]
        %v247 = vld [vmem:[%s182 + $0xd0] sm:$0xff]
        %v248 = vld [vmem:[%s182 + $0xd8] sm:$0xff]
        %v249 = vld [vmem:[%s182 + $0xe0] sm:$0xff]
        %v250 = vld [vmem:[%s182 + $0xe8] sm:$0xff]
        %v251 = vld [vmem:[%s182 + $0xf0] sm:$0xff]
        %v252 = vld [vmem:[%s182 + $0xf8] sm:$0xff]
        %v253 = vld [vmem:[%s182 + $0x100] sm:$0xff]
        %v254 = vld [vmem:[%s182 + $0x108] sm:$0xff]
        %v255 = vld [vmem:[%s182 + $0x110] sm:$0xff]
        %v256 = vld [vmem:[%s182 + $0x118] sm:$0xff]
        %v257 = vld [vmem:[%s182 + $0x120] sm:$0xff]
        %v258 = vld [vmem:[%s182 + $0x128] sm:$0xff]
        %v259 = vld [vmem:[%s182 + $0x130] sm:$0xff]
        %v260 = vld [vmem:[%s182 + $0x138] sm:$0xff]
        %v261 = vld [vmem:[%s182 + $0x140] sm:$0xff]
        %v262 = vld [vmem:[%s182 + $0x148] sm:$0xff]
        %v263 = vld [vmem:[%s182 + $0x150] sm:$0xff]
        %v264 = vld [vmem:[%s182 + $0x158] sm:$0xff]
        %v265 = vld [vmem:[%s182 + $0x160] sm:$0xff]
        %v266 = vld [vmem:[%s182 + $0x168] sm:$0xff]
        %v267 = vld [vmem:[%s182 + $0x170] sm:$0xff]
        %v268 = vld [vmem:[%s182 + $0x178] sm:$0xff]
        %v269 = vld [vmem:[%s182 + $0x180] sm:$0xff]
        %v270 = vld [vmem:[%s182 + $0x188] sm:$0xff]
        %v271 = vld [vmem:[%s182 + $0x190] sm:$0xff]
        %v272 = vld [vmem:[%s182 + $0x198] sm:$0xff]
        %v273 = vld [vmem:[%s182 + $0x1a0] sm:$0xff]
        %v274 = vld [vmem:[%s182 + $0x1a8] sm:$0xff]
        %v275 = vld [vmem:[%s182 + $0x1b0] sm:$0xff]
        %v276 = vld [vmem:[%s182 + $0x1b8] sm:$0xff]
        %v277 = vld [vmem:[%s182 + $0x1c0] sm:$0xff]
        %v278 = vld [vmem:[%s182 + $0x1c8] sm:$0xff]
        %v279 = vld [vmem:[%s182 + $0x1d0] sm:$0xff]
        %v280 = vld [vmem:[%s182 + $0x1d8] sm:$0xff]
        %v281 = vld [vmem:[%s182 + $0x1e0] sm:$0xff]
        %v282 = vld [vmem:[%s182 + $0x1e8] sm:$0xff]
        %v283 = vld [vmem:[%s182 + $0x1f0] sm:$0xff]
        %v284 = vld [vmem:[%s182 + $0x1f8] sm:$0xff]
        %v285 = vld [vmem:[%s182 + $0x200] sm:$0xff]
        %v286 = vld [vmem:[%s182 + $0x208] sm:$0xff]
        %v287 = vld [vmem:[%s182 + $0x210] sm:$0xff]
        %v288 = vld [vmem:[%s182 + $0x218] sm:$0xff]
        %v289 = vld [vmem:[%s182 + $0x220] sm:$0xff]
        %v290 = vld [vmem:[%s182 + $0x228] sm:$0xff]
        %v291 = vld [vmem:[%s182 + $0x230] sm:$0xff]
        %v292 = vld [vmem:[%s182 + $0x238] sm:$0xff]
        %v293 = vld [vmem:[%s182 + $0x240] sm:$0xff]
        %v294 = vld [vmem:[%s182 + $0x248] sm:$0xff]
        %v295 = vld [vmem:[%s182 + $0x250] sm:$0xff]
        %v296 = vld [vmem:[%s182 + $0x258] sm:$0xff]
        %v297 = vld [vmem:[%s182 + $0x260] sm:$0xff]
        %v298 = vld [vmem:[%s182 + $0x268] sm:$0xff]
        %v299 = vld [vmem:[%s182 + $0x270] sm:$0xff]
        %v300 = vld [vmem:[%s182 + $0x278] sm:$0xff]
        %v301 = vld [vmem:[%s182 + $0x280] sm:$0xff]
        %v302 = vld [vmem:[%s182 + $0x288] sm:$0xff]
        %v303 = vld [vmem:[%s182 + $0x290] sm:$0xff]
        %v304 = vld [vmem:[%s182 + $0x298] sm:$0xff]
        %v305 = vld [vmem:[%s182 + $0x2a0] sm:$0xff]
        %v306 = vld [vmem:[%s182 + $0x2a8] sm:$0xff]
        %v307 = vld [vmem:[%s182 + $0x2b0] sm:$0xff]
        %v308 = vld [vmem:[%s182 + $0x2b8] sm:$0xff]
        %v309 = vld [vmem:[%s182 + $0x2c0] sm:$0xff]
        %v310 = vld [vmem:[%s182 + $0x2c8] sm:$0xff]
        %v311 = vld [vmem:[%s182 + $0x2d0] sm:$0xff]
        %v312 = vld [vmem:[%s182 + $0x2d8] sm:$0xff]
        %v313 = vld [vmem:[%s182 + $0x2e0] sm:$0xff]
        %v314 = vld [vmem:[%s182 + $0x2e8] sm:$0xff]
        %v315 = vld [vmem:[%s182 + $0x2f0] sm:$0xff]
        %v316 = vld [vmem:[%s182 + $0x2f8] sm:$0xff]
        %v317 = vld [vmem:[%s182 + $0x300] sm:$0xff]
        %v318 = vld [vmem:[%s182 + $0x308] sm:$0xff]
        %v319 = vld [vmem:[%s182 + $0x310] sm:$0xff]
        %v320 = vld [vmem:[%s182 + $0x318] sm:$0xff]
        %v321 = vld [vmem:[%s182 + $0x320] sm:$0xff]
        %v322 = vld [vmem:[%s182 + $0x328] sm:$0xff]
        %v323 = vld [vmem:[%s182 + $0x330] sm:$0xff]
        %v324 = vld [vmem:[%s182 + $0x338] sm:$0xff]
        %v325 = vld [vmem:[%s182 + $0x340] sm:$0xff]
        %v326 = vld [vmem:[%s182 + $0x348] sm:$0xff]
        %v327 = vld [vmem:[%s182 + $0x350] sm:$0xff]
        %v328 = vld [vmem:[%s182 + $0x358] sm:$0xff]
        %v329 = vld [vmem:[%s182 + $0x360] sm:$0xff]
        %v330 = vld [vmem:[%s182 + $0x368] sm:$0xff]
        %v331 = vld [vmem:[%s182 + $0x370] sm:$0xff]
        %v332 = vld [vmem:[%s182 + $0x378] sm:$0xff]
        %v333 = vld [vmem:[%s182 + $0x380] sm:$0xff]
        %v334 = vld [vmem:[%s182 + $0x388] sm:$0xff]
        %v335 = vld [vmem:[%s182 + $0x390] sm:$0xff]
        %v336 = vld [vmem:[%s182 + $0x398] sm:$0xff]
        %v337 = vld [vmem:[%s182 + $0x3a0] sm:$0xff]
        %v338 = vld [vmem:[%s182 + $0x3a8] sm:$0xff]
        %v339 = vld [vmem:[%s182 + $0x3b0] sm:$0xff]
        %v340 = vld [vmem:[%s182 + $0x3b8] sm:$0xff]
        %v341 = vld [vmem:[%s182 + $0x3c0] sm:$0xff]
        %v342 = vld [vmem:[%s182 + $0x3c8] sm:$0xff]
        %v343 = vld [vmem:[%s182 + $0x3d0] sm:$0xff]
        %v344 = vld [vmem:[%s182 + $0x3d8] sm:$0xff]
        %v345 = vld [vmem:[%s182 + $0x3e0] sm:$0xff]
        %v346 = vld [vmem:[%s182 + $0x3e8] sm:$0xff]
        %v347 = vld [vmem:[%s182 + $0x3f0] sm:$0xff]
        %v348 = vld [vmem:[%s182 + $0x3f8] sm:$0xff]
        %v349 = vpack.c.bf16 %v225, %v221
        %v350 = vpack.c.bf16 %v226, %v222
        %v351 = vpack.c.bf16 %v227, %v223
        %v352 = vpack.c.bf16 %v228, %v224
        %v353 = vpack.c.bf16 %v233, %v229
        %v354 = vpack.c.bf16 %v234, %v230
        %v355 = vpack.c.bf16 %v235, %v231
        %v356 = vpack.c.bf16 %v236, %v232
        %v357 = vpack.c.bf16 %v241, %v237
        %v358 = vpack.c.bf16 %v242, %v238
        %v359 = vpack.c.bf16 %v243, %v239
        %v360 = vpack.c.bf16 %v244, %v240
        %v361 = vpack.c.bf16 %v249, %v245
        %v362 = vpack.c.bf16 %v250, %v246
        %v363 = vpack.c.bf16 %v251, %v247
        %v364 = vpack.c.bf16 %v252, %v248
        %v365 = vpack.c.bf16 %v257, %v253
        %v366 = vpack.c.bf16 %v258, %v254
        %v367 = vpack.c.bf16 %v259, %v255
        %v368 = vpack.c.bf16 %v260, %v256
        %v369 = vpack.c.bf16 %v265, %v261
        %v370 = vpack.c.bf16 %v266, %v262
        %v371 = vpack.c.bf16 %v267, %v263
        %v372 = vpack.c.bf16 %v268, %v264
        %v373 = vpack.c.bf16 %v273, %v269
        %v374 = vpack.c.bf16 %v274, %v270
        %v375 = vpack.c.bf16 %v275, %v271
        %v376 = vpack.c.bf16 %v276, %v272
        %v377 = vpack.c.bf16 %v281, %v277
        %v378 = vpack.c.bf16 %v282, %v278
        %v379 = vpack.c.bf16 %v283, %v279
        %v380 = vpack.c.bf16 %v284, %v280
        %v381 = vpack.c.bf16 %v289, %v285
        %v382 = vpack.c.bf16 %v290, %v286
        %v383 = vpack.c.bf16 %v291, %v287
        %v384 = vpack.c.bf16 %v292, %v288
        %v385 = vpack.c.bf16 %v297, %v293
        %v386 = vpack.c.bf16 %v298, %v294
        %v387 = vpack.c.bf16 %v299, %v295
        %v388 = vpack.c.bf16 %v300, %v296
        %v389 = vpack.c.bf16 %v305, %v301
        %v390 = vpack.c.bf16 %v306, %v302
        %v391 = vpack.c.bf16 %v307, %v303
        %v392 = vpack.c.bf16 %v308, %v304
        %v393 = vpack.c.bf16 %v313, %v309
        %v394 = vpack.c.bf16 %v314, %v310
        %v395 = vpack.c.bf16 %v315, %v311
        %v396 = vpack.c.bf16 %v316, %v312
        %v397 = vpack.c.bf16 %v321, %v317
        %v398 = vpack.c.bf16 %v322, %v318
        %v399 = vpack.c.bf16 %v323, %v319
        %v400 = vpack.c.bf16 %v324, %v320
        %v401 = vpack.c.bf16 %v329, %v325
        %v402 = vpack.c.bf16 %v330, %v326
        %v403 = vpack.c.bf16 %v331, %v327
        %v404 = vpack.c.bf16 %v332, %v328
        %v405 = vpack.c.bf16 %v337, %v333
        %v406 = vpack.c.bf16 %v338, %v334
        %v407 = vpack.c.bf16 %v339, %v335
        %v408 = vpack.c.bf16 %v340, %v336
        %v409 = vpack.c.bf16 %v345, %v341
        %v410 = vpack.c.bf16 %v346, %v342
        %v411 = vpack.c.bf16 %v347, %v343
        %v412 = vpack.c.bf16 %v348, %v344
        %v413 = vld [vmem:[%s191] sm:$0xff]
        %v414 = vld [vmem:[%s191 + $0x8] sm:$0xff]
        %v415 = vld [vmem:[%s191 + $0x10] sm:$0xff]
        %v416 = vld [vmem:[%s191 + $0x18] sm:$0xff]
        %v417 = vld [vmem:[%s191 + $0x20] sm:$0xff]
        %v418 = vld [vmem:[%s191 + $0x28] sm:$0xff]
        %v419 = vld [vmem:[%s191 + $0x30] sm:$0xff]
        %v420 = vld [vmem:[%s191 + $0x38] sm:$0xff]
        %v421 = vld [vmem:[%s191 + $0x40] sm:$0xff]
        %v422 = vld [vmem:[%s191 + $0x48] sm:$0xff]
        %v423 = vld [vmem:[%s191 + $0x50] sm:$0xff]
        %v424 = vld [vmem:[%s191 + $0x58] sm:$0xff]
        %v425 = vld [vmem:[%s191 + $0x60] sm:$0xff]
        %v426 = vld [vmem:[%s191 + $0x68] sm:$0xff]
        %v427 = vld [vmem:[%s191 + $0x70] sm:$0xff]
        %v428 = vld [vmem:[%s191 + $0x78] sm:$0xff]
        %v429 = vld [vmem:[%s191 + $0x80] sm:$0xff]
        %v430 = vld [vmem:[%s191 + $0x88] sm:$0xff]
        %v431 = vld [vmem:[%s191 + $0x90] sm:$0xff]
        %v432 = vld [vmem:[%s191 + $0x98] sm:$0xff]
        %v433 = vld [vmem:[%s191 + $0xa0] sm:$0xff]
        %v434 = vld [vmem:[%s191 + $0xa8] sm:$0xff]
        %v435 = vld [vmem:[%s191 + $0xb0] sm:$0xff]
        %v436 = vld [vmem:[%s191 + $0xb8] sm:$0xff]
        %v437 = vld [vmem:[%s191 + $0xc0] sm:$0xff]
        %v438 = vld [vmem:[%s191 + $0xc8] sm:$0xff]
        %v439 = vld [vmem:[%s191 + $0xd0] sm:$0xff]
        %v440 = vld [vmem:[%s191 + $0xd8] sm:$0xff]
        %v441 = vld [vmem:[%s191 + $0xe0] sm:$0xff]
        %v442 = vld [vmem:[%s191 + $0xe8] sm:$0xff]
        %v443 = vld [vmem:[%s191 + $0xf0] sm:$0xff]
        %v444 = vld [vmem:[%s191 + $0xf8] sm:$0xff]
        %v445 = vld [vmem:[%s191 + $0x100] sm:$0xff]
        %v446 = vld [vmem:[%s191 + $0x108] sm:$0xff]
        %v447 = vld [vmem:[%s191 + $0x110] sm:$0xff]
        %v448 = vld [vmem:[%s191 + $0x118] sm:$0xff]
        %v449 = vld [vmem:[%s191 + $0x120] sm:$0xff]
        %v450 = vld [vmem:[%s191 + $0x128] sm:$0xff]
        %v451 = vld [vmem:[%s191 + $0x130] sm:$0xff]
        %v452 = vld [vmem:[%s191 + $0x138] sm:$0xff]
        %v453 = vld [vmem:[%s191 + $0x140] sm:$0xff]
        %v454 = vld [vmem:[%s191 + $0x148] sm:$0xff]
        %v455 = vld [vmem:[%s191 + $0x150] sm:$0xff]
        %v456 = vld [vmem:[%s191 + $0x158] sm:$0xff]
        %v457 = vld [vmem:[%s191 + $0x160] sm:$0xff]
        %v458 = vld [vmem:[%s191 + $0x168] sm:$0xff]
        %v459 = vld [vmem:[%s191 + $0x170] sm:$0xff]
        %v460 = vld [vmem:[%s191 + $0x178] sm:$0xff]
        %v461 = vld [vmem:[%s191 + $0x180] sm:$0xff]
        %v462 = vld [vmem:[%s191 + $0x188] sm:$0xff]
        %v463 = vld [vmem:[%s191 + $0x190] sm:$0xff]
        %v464 = vld [vmem:[%s191 + $0x198] sm:$0xff]
        %v465 = vld [vmem:[%s191 + $0x1a0] sm:$0xff]
        %v466 = vld [vmem:[%s191 + $0x1a8] sm:$0xff]
        %v467 = vld [vmem:[%s191 + $0x1b0] sm:$0xff]
        %v468 = vld [vmem:[%s191 + $0x1b8] sm:$0xff]
        %v469 = vld [vmem:[%s191 + $0x1c0] sm:$0xff]
        %v470 = vld [vmem:[%s191 + $0x1c8] sm:$0xff]
        %v471 = vld [vmem:[%s191 + $0x1d0] sm:$0xff]
        %v472 = vld [vmem:[%s191 + $0x1d8] sm:$0xff]
        %v473 = vld [vmem:[%s191 + $0x1e0] sm:$0xff]
        %v474 = vld [vmem:[%s191 + $0x1e8] sm:$0xff]
        %v475 = vld [vmem:[%s191 + $0x1f0] sm:$0xff]
        %v476 = vld [vmem:[%s191 + $0x1f8] sm:$0xff]
        %v477 = vld [vmem:[%s191 + $0x200] sm:$0xff]
        %v478 = vld [vmem:[%s191 + $0x208] sm:$0xff]
        %v479 = vld [vmem:[%s191 + $0x210] sm:$0xff]
        %v480 = vld [vmem:[%s191 + $0x218] sm:$0xff]
        %v481 = vld [vmem:[%s191 + $0x220] sm:$0xff]
        %v482 = vld [vmem:[%s191 + $0x228] sm:$0xff]
        %v483 = vld [vmem:[%s191 + $0x230] sm:$0xff]
        %v484 = vld [vmem:[%s191 + $0x238] sm:$0xff]
        %v485 = vld [vmem:[%s191 + $0x240] sm:$0xff]
        %v486 = vld [vmem:[%s191 + $0x248] sm:$0xff]
        %v487 = vld [vmem:[%s191 + $0x250] sm:$0xff]
        %v488 = vld [vmem:[%s191 + $0x258] sm:$0xff]
        %v489 = vld [vmem:[%s191 + $0x260] sm:$0xff]
        %v490 = vld [vmem:[%s191 + $0x268] sm:$0xff]
        %v491 = vld [vmem:[%s191 + $0x270] sm:$0xff]
        %v492 = vld [vmem:[%s191 + $0x278] sm:$0xff]
        %v493 = vld [vmem:[%s191 + $0x280] sm:$0xff]
        %v494 = vld [vmem:[%s191 + $0x288] sm:$0xff]
        %v495 = vld [vmem:[%s191 + $0x290] sm:$0xff]
        %v496 = vld [vmem:[%s191 + $0x298] sm:$0xff]
        %v497 = vld [vmem:[%s191 + $0x2a0] sm:$0xff]
        %v498 = vld [vmem:[%s191 + $0x2a8] sm:$0xff]
        %v499 = vld [vmem:[%s191 + $0x2b0] sm:$0xff]
        %v500 = vld [vmem:[%s191 + $0x2b8] sm:$0xff]
        %v501 = vld [vmem:[%s191 + $0x2c0] sm:$0xff]
        %v502 = vld [vmem:[%s191 + $0x2c8] sm:$0xff]
        %v503 = vld [vmem:[%s191 + $0x2d0] sm:$0xff]
        %v504 = vld [vmem:[%s191 + $0x2d8] sm:$0xff]
        %v505 = vld [vmem:[%s191 + $0x2e0] sm:$0xff]
        %v506 = vld [vmem:[%s191 + $0x2e8] sm:$0xff]
        %v507 = vld [vmem:[%s191 + $0x2f0] sm:$0xff]
        %v508 = vld [vmem:[%s191 + $0x2f8] sm:$0xff]
        %v509 = vld [vmem:[%s191 + $0x300] sm:$0xff]
        %v510 = vld [vmem:[%s191 + $0x308] sm:$0xff]
        %v511 = vld [vmem:[%s191 + $0x310] sm:$0xff]
        %v512 = vld [vmem:[%s191 + $0x318] sm:$0xff]
        %v513 = vld [vmem:[%s191 + $0x320] sm:$0xff]
        %v514 = vld [vmem:[%s191 + $0x328] sm:$0xff]
        %v515 = vld [vmem:[%s191 + $0x330] sm:$0xff]
        %v516 = vld [vmem:[%s191 + $0x338] sm:$0xff]
        %v517 = vld [vmem:[%s191 + $0x340] sm:$0xff]
        %v518 = vld [vmem:[%s191 + $0x348] sm:$0xff]
        %v519 = vld [vmem:[%s191 + $0x350] sm:$0xff]
        %v520 = vld [vmem:[%s191 + $0x358] sm:$0xff]
        %v521 = vld [vmem:[%s191 + $0x360] sm:$0xff]
        %v522 = vld [vmem:[%s191 + $0x368] sm:$0xff]
        %v523 = vld [vmem:[%s191 + $0x370] sm:$0xff]
        %v524 = vld [vmem:[%s191 + $0x378] sm:$0xff]
        %v525 = vld [vmem:[%s191 + $0x380] sm:$0xff]
        %v526 = vld [vmem:[%s191 + $0x388] sm:$0xff]
        %v527 = vld [vmem:[%s191 + $0x390] sm:$0xff]
        %v528 = vld [vmem:[%s191 + $0x398] sm:$0xff]
        %v529 = vld [vmem:[%s191 + $0x3a0] sm:$0xff]
        %v530 = vld [vmem:[%s191 + $0x3a8] sm:$0xff]
        %v531 = vld [vmem:[%s191 + $0x3b0] sm:$0xff]
        %v532 = vld [vmem:[%s191 + $0x3b8] sm:$0xff]
        %v533 = vld [vmem:[%s191 + $0x3c0] sm:$0xff]
        %v534 = vld [vmem:[%s191 + $0x3c8] sm:$0xff]
        %v535 = vld [vmem:[%s191 + $0x3d0] sm:$0xff]
        %v536 = vld [vmem:[%s191 + $0x3d8] sm:$0xff]
        %v537 = vld [vmem:[%s191 + $0x3e0] sm:$0xff]
        %v538 = vld [vmem:[%s191 + $0x3e8] sm:$0xff]
        %v539 = vld [vmem:[%s191 + $0x3f0] sm:$0xff]
        %v540 = vld [vmem:[%s191 + $0x3f8] sm:$0xff]
        %v541 = vpack.c.bf16 %v415, %v413
        %v542 = vpack.c.bf16 %v416, %v414
        %v543 = vpack.c.bf16 %v419, %v417
        %v544 = vpack.c.bf16 %v420, %v418
        %v545 = vpack.c.bf16 %v423, %v421
        %v546 = vpack.c.bf16 %v424, %v422
        %v547 = vpack.c.bf16 %v427, %v425
        %v548 = vpack.c.bf16 %v428, %v426
        %v549 = vpack.c.bf16 %v431, %v429
        %v550 = vpack.c.bf16 %v432, %v430
        %v551 = vpack.c.bf16 %v435, %v433
        %v552 = vpack.c.bf16 %v436, %v434
        %v553 = vpack.c.bf16 %v439, %v437
        %v554 = vpack.c.bf16 %v440, %v438
        %v555 = vpack.c.bf16 %v443, %v441
        %v556 = vpack.c.bf16 %v444, %v442
        %v557 = vpack.c.bf16 %v447, %v445
        %v558 = vpack.c.bf16 %v448, %v446
        %v559 = vpack.c.bf16 %v451, %v449
        %v560 = vpack.c.bf16 %v452, %v450
        %v561 = vpack.c.bf16 %v455, %v453
        %v562 = vpack.c.bf16 %v456, %v454
        %v563 = vpack.c.bf16 %v459, %v457
        %v564 = vpack.c.bf16 %v460, %v458
        %v565 = vpack.c.bf16 %v463, %v461
        %v566 = vpack.c.bf16 %v464, %v462
        %v567 = vpack.c.bf16 %v467, %v465
        %v568 = vpack.c.bf16 %v468, %v466
        %v569 = vpack.c.bf16 %v471, %v469
        %v570 = vpack.c.bf16 %v472, %v470
        %v571 = vpack.c.bf16 %v475, %v473
        %v572 = vpack.c.bf16 %v476, %v474
        %v573 = vpack.c.bf16 %v479, %v477
        %v574 = vpack.c.bf16 %v480, %v478
        %v575 = vpack.c.bf16 %v483, %v481
        %v576 = vpack.c.bf16 %v484, %v482
        %v577 = vpack.c.bf16 %v487, %v485
        %v578 = vpack.c.bf16 %v488, %v486
        %v579 = vpack.c.bf16 %v491, %v489
        %v580 = vpack.c.bf16 %v492, %v490
        %v581 = vpack.c.bf16 %v495, %v493
        %v582 = vpack.c.bf16 %v496, %v494
        %v583 = vpack.c.bf16 %v499, %v497
        %v584 = vpack.c.bf16 %v500, %v498
        %v585 = vpack.c.bf16 %v503, %v501
        %v586 = vpack.c.bf16 %v504, %v502
        %v587 = vpack.c.bf16 %v507, %v505
        %v588 = vpack.c.bf16 %v508, %v506
        %v589 = vpack.c.bf16 %v511, %v509
        %v590 = vpack.c.bf16 %v512, %v510
        %v591 = vpack.c.bf16 %v515, %v513
        %v592 = vpack.c.bf16 %v516, %v514
        %v593 = vpack.c.bf16 %v519, %v517
        %v594 = vpack.c.bf16 %v520, %v518
        %v595 = vpack.c.bf16 %v523, %v521
        %v596 = vpack.c.bf16 %v524, %v522
        %v597 = vpack.c.bf16 %v527, %v525
        %v598 = vpack.c.bf16 %v528, %v526
        %v599 = vpack.c.bf16 %v531, %v529
        %v600 = vpack.c.bf16 %v532, %v530
        %v601 = vpack.c.bf16 %v535, %v533
        %v602 = vpack.c.bf16 %v536, %v534
        %v603 = vpack.c.bf16 %v539, %v537
        %v604 = vpack.c.bf16 %v540, %v538
        %605 = vmatprep.subr.bf16.mxu0 %v542
        %606 = vmatpush1.bf16.msra.mxu0 %v541
        %607 = vmatprep.subr.bf16.mxu0 %v544
        %608 = vmatpush1.bf16.msra.mxu0 %v543
        %609 = vmatprep.subr.bf16.mxu0 %v546
        %610 = vmatpush1.bf16.msra.mxu0 %v545
        %611 = vmatprep.subr.bf16.mxu0 %v548
        %612 = vmatpush1.bf16.msra.mxu0 %v547
        %613 = vmatprep.subr.bf16.mxu0 %v550
        %614 = vmatpush1.bf16.msra.mxu0 %v549
        %615 = vmatprep.subr.bf16.mxu0 %v552
        %616 = vmatpush1.bf16.msra.mxu0 %v551
        %617 = vmatprep.subr.bf16.mxu0 %v554
        %618 = vmatpush1.bf16.msra.mxu0 %v553
        %619 = vmatprep.subr.bf16.mxu0 %v556
        %620 = vmatpush1.bf16.msra.mxu0 %v555
        %621 = vmatprep.subr.bf16.mxu0 %v558
        %622 = vmatpush1.bf16.msra.mxu0 %v557
        %623 = vmatprep.subr.bf16.mxu0 %v560
        %624 = vmatpush1.bf16.msra.mxu0 %v559
        %625 = vmatprep.subr.bf16.mxu0 %v562
        %626 = vmatpush1.bf16.msra.mxu0 %v561
        %627 = vmatprep.subr.bf16.mxu0 %v564
        %628 = vmatpush1.bf16.msra.mxu0 %v563
        %629 = vmatprep.subr.bf16.mxu0 %v566
        %630 = vmatpush1.bf16.msra.mxu0 %v565
        %631 = vmatprep.subr.bf16.mxu0 %v568
        %632 = vmatpush1.bf16.msra.mxu0 %v567
        %633 = vmatprep.subr.bf16.mxu0 %v570
        %634 = vmatpush1.bf16.msra.mxu0 %v569
        %635 = vmatprep.subr.bf16.mxu0 %v572
        %636 = vmatpush1.bf16.msra.mxu0 %v571
        %637 = vmatprep.mubr.bf16.mxu0 %v350
        %638 = vmatmul.mubr.bf16.gmra.mrb[0].mxu0 %v349
        %v639 = vpop.f32.mrb[0].mxu0
        %v640 = vadd.f32 0.0, %v639
        %v641 = vpop.f32.mrb[0].mxu0
        %v642 = vadd.f32 0.0, %v641
        %v643 = vpop.f32.mrb[0].mxu0
        %v644 = vadd.f32 0.0, %v643
        %v645 = vpop.f32.mrb[0].mxu0
        %v646 = vadd.f32 0.0, %v645
        %647 = vmatprep.mubr.bf16.mxu0 %v354
        %648 = vmatmul.mubr.bf16.gmra.mrb[0].mxu0 %v353
        %v649 = vpop.f32.mrb[0].mxu0
        %v650 = vadd.f32 0.0, %v649
        %v651 = vpop.f32.mrb[0].mxu0
        %v652 = vadd.f32 0.0, %v651
        %v653 = vpop.f32.mrb[0].mxu0
        %v654 = vadd.f32 0.0, %v653
        %v655 = vpop.f32.mrb[0].mxu0
        %v656 = vadd.f32 0.0, %v655
        %657 = vmatprep.mubr.bf16.mxu0 %v358
        %658 = vmatmul.mubr.bf16.gmra.mrb[0].mxu0 %v357
        %v659 = vpop.f32.mrb[0].mxu0
        %v660 = vadd.f32 0.0, %v659
        %v661 = vpop.f32.mrb[0].mxu0
        %v662 = vadd.f32 0.0, %v661
        %v663 = vpop.f32.mrb[0].mxu0
        %v664 = vadd.f32 0.0, %v663
        %v665 = vpop.f32.mrb[0].mxu0
        %v666 = vadd.f32 0.0, %v665
        %667 = vmatprep.mubr.bf16.mxu0 %v362
        %668 = vmatmul.mubr.bf16.gmra.mrb[0].mxu0 %v361
        %v669 = vpop.f32.mrb[0].mxu0
        %v670 = vadd.f32 0.0, %v669
        %v671 = vpop.f32.mrb[0].mxu0
        %v672 = vadd.f32 0.0, %v671
        %v673 = vpop.f32.mrb[0].mxu0
        %v674 = vadd.f32 0.0, %v673
        %v675 = vpop.f32.mrb[0].mxu0
        %v676 = vadd.f32 0.0, %v675
        %677 = vmatprep.mubr.bf16.mxu0 %v366
        %678 = vmatmul.mubr.bf16.gmra.mrb[0].mxu0 %v365
        %v679 = vpop.f32.mrb[0].mxu0
        %v680 = vadd.f32 0.0, %v679
        %v681 = vpop.f32.mrb[0].mxu0
        %v682 = vadd.f32 0.0, %v681
        %v683 = vpop.f32.mrb[0].mxu0
        %v684 = vadd.f32 0.0, %v683
        %v685 = vpop.f32.mrb[0].mxu0
        %v686 = vadd.f32 0.0, %v685
        %687 = vmatprep.mubr.bf16.mxu0 %v370
        %688 = vmatmul.mubr.bf16.gmra.mrb[0].mxu0 %v369
        %v689 = vpop.f32.mrb[0].mxu0
        %v690 = vadd.f32 0.0, %v689
        %v691 = vpop.f32.mrb[0].mxu0
        %v692 = vadd.f32 0.0, %v691
        %v693 = vpop.f32.mrb[0].mxu0
        %v694 = vadd.f32 0.0, %v693
        %v695 = vpop.f32.mrb[0].mxu0
        %v696 = vadd.f32 0.0, %v695
        %697 = vmatprep.mubr.bf16.mxu0 %v374
        %698 = vmatmul.mubr.bf16.gmra.mrb[0].mxu0 %v373
        %v699 = vpop.f32.mrb[0].mxu0
        %v700 = vadd.f32 0.0, %v699
        %v701 = vpop.f32.mrb[0].mxu0
        %v702 = vadd.f32 0.0, %v701
        %v703 = vpop.f32.mrb[0].mxu0
        %v704 = vadd.f32 0.0, %v703
        %v705 = vpop.f32.mrb[0].mxu0
        %v706 = vadd.f32 0.0, %v705
        %707 = vmatprep.mubr.bf16.mxu0 %v378
        %708 = vmatmul.mubr.bf16.gmra.mrb[0].mxu0 %v377
        %v709 = vpop.f32.mrb[0].mxu0
        %v710 = vadd.f32 0.0, %v709
        %v711 = vpop.f32.mrb[0].mxu0
        %v712 = vadd.f32 0.0, %v711
        %v713 = vpop.f32.mrb[0].mxu0
        %v714 = vadd.f32 0.0, %v713
        %v715 = vpop.f32.mrb[0].mxu0
        %v716 = vadd.f32 0.0, %v715
        %717 = vmatprep.mubr.bf16.mxu0 %v382
        %718 = vmatmul.mubr.bf16.gmra.mrb[0].mxu0 %v381
        %v719 = vpop.f32.mrb[0].mxu0
        %v720 = vadd.f32 0.0, %v719
        %v721 = vpop.f32.mrb[0].mxu0
        %v722 = vadd.f32 0.0, %v721
        %v723 = vpop.f32.mrb[0].mxu0
        %v724 = vadd.f32 0.0, %v723
        %v725 = vpop.f32.mrb[0].mxu0
        %v726 = vadd.f32 0.0, %v725
        %727 = vmatprep.mubr.bf16.mxu0 %v386
        %728 = vmatmul.mubr.bf16.gmra.mrb[0].mxu0 %v385
        %v729 = vpop.f32.mrb[0].mxu0
        %v730 = vadd.f32 0.0, %v729
        %v731 = vpop.f32.mrb[0].mxu0
        %v732 = vadd.f32 0.0, %v731
        %v733 = vpop.f32.mrb[0].mxu0
        %v734 = vadd.f32 0.0, %v733
        %v735 = vpop.f32.mrb[0].mxu0
        %v736 = vadd.f32 0.0, %v735
        %737 = vmatprep.mubr.bf16.mxu0 %v390
        %738 = vmatmul.mubr.bf16.gmra.mrb[0].mxu0 %v389
        %v739 = vpop.f32.mrb[0].mxu0
        %v740 = vadd.f32 0.0, %v739
        %v741 = vpop.f32.mrb[0].mxu0
        %v742 = vadd.f32 0.0, %v741
        %v743 = vpop.f32.mrb[0].mxu0
        %v744 = vadd.f32 0.0, %v743
        %v745 = vpop.f32.mrb[0].mxu0
        %v746 = vadd.f32 0.0, %v745
        %747 = vmatprep.mubr.bf16.mxu0 %v394
        %748 = vmatmul.mubr.bf16.gmra.mrb[0].mxu0 %v393
        %v749 = vpop.f32.mrb[0].mxu0
        %v750 = vadd.f32 0.0, %v749
        %v751 = vpop.f32.mrb[0].mxu0
        %v752 = vadd.f32 0.0, %v751
        %v753 = vpop.f32.mrb[0].mxu0
        %v754 = vadd.f32 0.0, %v753
        %v755 = vpop.f32.mrb[0].mxu0
        %v756 = vadd.f32 0.0, %v755
        %757 = vmatprep.mubr.bf16.mxu0 %v398
        %758 = vmatmul.mubr.bf16.gmra.mrb[0].mxu0 %v397
        %v759 = vpop.f32.mrb[0].mxu0
        %v760 = vadd.f32 0.0, %v759
        %v761 = vpop.f32.mrb[0].mxu0
        %v762 = vadd.f32 0.0, %v761
        %v763 = vpop.f32.mrb[0].mxu0
        %v764 = vadd.f32 0.0, %v763
        %v765 = vpop.f32.mrb[0].mxu0
        %v766 = vadd.f32 0.0, %v765
        %767 = vmatprep.mubr.bf16.mxu0 %v402
        %768 = vmatmul.mubr.bf16.gmra.mrb[0].mxu0 %v401
        %v769 = vpop.f32.mrb[0].mxu0
        %v770 = vadd.f32 0.0, %v769
        %v771 = vpop.f32.mrb[0].mxu0
        %v772 = vadd.f32 0.0, %v771
        %v773 = vpop.f32.mrb[0].mxu0
        %v774 = vadd.f32 0.0, %v773
        %v775 = vpop.f32.mrb[0].mxu0
        %v776 = vadd.f32 0.0, %v775
        %777 = vmatprep.mubr.bf16.mxu0 %v406
        %778 = vmatmul.mubr.bf16.gmra.mrb[0].mxu0 %v405
        %v779 = vpop.f32.mrb[0].mxu0
        %v780 = vadd.f32 0.0, %v779
        %v781 = vpop.f32.mrb[0].mxu0
        %v782 = vadd.f32 0.0, %v781
        %v783 = vpop.f32.mrb[0].mxu0
        %v784 = vadd.f32 0.0, %v783
        %v785 = vpop.f32.mrb[0].mxu0
        %v786 = vadd.f32 0.0, %v785
        %787 = vmatprep.mubr.bf16.mxu0 %v410
        %788 = vmatmul.mubr.bf16.gmra.mrb[0].mxu0 %v409
        %v789 = vpop.f32.mrb[0].mxu0
        %v790 = vadd.f32 0.0, %v789
        %v791 = vpop.f32.mrb[0].mxu0
        %v792 = vadd.f32 0.0, %v791
        %v793 = vpop.f32.mrb[0].mxu0
        %v794 = vadd.f32 0.0, %v793
        %v795 = vpop.f32.mrb[0].mxu0
        %v796 = vadd.f32 0.0, %v795
        %797 = vdwg.mxu0
        %798 = vmatprep.subr.bf16.mxu0 %v574
        %799 = vmatpush1.bf16.msra.mxu0 %v573
        %800 = vmatprep.subr.bf16.mxu0 %v576
        %801 = vmatpush1.bf16.msra.mxu0 %v575
        %802 = vmatprep.subr.bf16.mxu0 %v578
        %803 = vmatpush1.bf16.msra.mxu0 %v577
        %804 = vmatprep.subr.bf16.mxu0 %v580
        %805 = vmatpush1.bf16.msra.mxu0 %v579
        %806 = vmatprep.subr.bf16.mxu0 %v582
        %807 = vmatpush1.bf16.msra.mxu0 %v581
        %808 = vmatprep.subr.bf16.mxu0 %v584
        %809 = vmatpush1.bf16.msra.mxu0 %v583
        %810 = vmatprep.subr.bf16.mxu0 %v586
        %811 = vmatpush1.bf16.msra.mxu0 %v585
        %812 = vmatprep.subr.bf16.mxu0 %v588
        %813 = vmatpush1.bf16.msra.mxu0 %v587
        %814 = vmatprep.subr.bf16.mxu0 %v590
        %815 = vmatpush1.bf16.msra.mxu0 %v589
        %816 = vmatprep.subr.bf16.mxu0 %v592
        %817 = vmatpush1.bf16.msra.mxu0 %v591
        %818 = vmatprep.subr.bf16.mxu0 %v594
        %819 = vmatpush1.bf16.msra.mxu0 %v593
        %820 = vmatprep.subr.bf16.mxu0 %v596
        %821 = vmatpush1.bf16.msra.mxu0 %v595
        %822 = vmatprep.subr.bf16.mxu0 %v598
        %823 = vmatpush1.bf16.msra.mxu0 %v597
        %824 = vmatprep.subr.bf16.mxu0 %v600
        %825 = vmatpush1.bf16.msra.mxu0 %v599
        %826 = vmatprep.subr.bf16.mxu0 %v602
        %827 = vmatpush1.bf16.msra.mxu0 %v601
        %828 = vmatprep.subr.bf16.mxu0 %v604
        %829 = vmatpush1.bf16.msra.mxu0 %v603
        %830 = vmatprep.mubr.bf16.mxu0 %v352
        %831 = vmatmul.mubr.bf16.gmra.mrb[0].mxu0 %v351
        %v832 = vpop.f32.mrb[0].mxu0
        %v833 = vadd.f32 %v640, %v832
        %v834 = vpop.f32.mrb[0].mxu0
        %v835 = vadd.f32 %v642, %v834
        %v836 = vpop.f32.mrb[0].mxu0
        %v837 = vadd.f32 %v644, %v836
        %v838 = vpop.f32.mrb[0].mxu0
        %v839 = vadd.f32 %v646, %v838
        %840 = vmatprep.mubr.bf16.mxu0 %v356
        %841 = vmatmul.mubr.bf16.gmra.mrb[0].mxu0 %v355
        %v842 = vpop.f32.mrb[0].mxu0
        %v843 = vadd.f32 %v650, %v842
        %v844 = vpop.f32.mrb[0].mxu0
        %v845 = vadd.f32 %v652, %v844
        %v846 = vpop.f32.mrb[0].mxu0
        %v847 = vadd.f32 %v654, %v846
        %v848 = vpop.f32.mrb[0].mxu0
        %v849 = vadd.f32 %v656, %v848
        %850 = vmatprep.mubr.bf16.mxu0 %v360
        %851 = vmatmul.mubr.bf16.gmra.mrb[0].mxu0 %v359
        %v852 = vpop.f32.mrb[0].mxu0
        %v853 = vadd.f32 %v660, %v852
        %v854 = vpop.f32.mrb[0].mxu0
        %v855 = vadd.f32 %v662, %v854
        %v856 = vpop.f32.mrb[0].mxu0
        %v857 = vadd.f32 %v664, %v856
        %v858 = vpop.f32.mrb[0].mxu0
        %v859 = vadd.f32 %v666, %v858
        %860 = vmatprep.mubr.bf16.mxu0 %v364
        %861 = vmatmul.mubr.bf16.gmra.mrb[0].mxu0 %v363
        %v862 = vpop.f32.mrb[0].mxu0
        %v863 = vadd.f32 %v670, %v862
        %v864 = vpop.f32.mrb[0].mxu0
        %v865 = vadd.f32 %v672, %v864
        %v866 = vpop.f32.mrb[0].mxu0
        %v867 = vadd.f32 %v674, %v866
        %v868 = vpop.f32.mrb[0].mxu0
        %v869 = vadd.f32 %v676, %v868
        %870 = vmatprep.mubr.bf16.mxu0 %v368
        %871 = vmatmul.mubr.bf16.gmra.mrb[0].mxu0 %v367
        %v872 = vpop.f32.mrb[0].mxu0
        %v873 = vadd.f32 %v680, %v872
        %v874 = vpop.f32.mrb[0].mxu0
        %v875 = vadd.f32 %v682, %v874
        %v876 = vpop.f32.mrb[0].mxu0
        %v877 = vadd.f32 %v684, %v876
        %v878 = vpop.f32.mrb[0].mxu0
        %v879 = vadd.f32 %v686, %v878
        %880 = vmatprep.mubr.bf16.mxu0 %v372
        %881 = vmatmul.mubr.bf16.gmra.mrb[0].mxu0 %v371
        %v882 = vpop.f32.mrb[0].mxu0
        %v883 = vadd.f32 %v690, %v882
        %v884 = vpop.f32.mrb[0].mxu0
        %v885 = vadd.f32 %v692, %v884
        %v886 = vpop.f32.mrb[0].mxu0
        %v887 = vadd.f32 %v694, %v886
        %v888 = vpop.f32.mrb[0].mxu0
        %v889 = vadd.f32 %v696, %v888
        %890 = vmatprep.mubr.bf16.mxu0 %v376
        %891 = vmatmul.mubr.bf16.gmra.mrb[0].mxu0 %v375
        %v892 = vpop.f32.mrb[0].mxu0
        %v893 = vadd.f32 %v700, %v892
        %v894 = vpop.f32.mrb[0].mxu0
        %v895 = vadd.f32 %v702, %v894
        %v896 = vpop.f32.mrb[0].mxu0
        %v897 = vadd.f32 %v704, %v896
        %v898 = vpop.f32.mrb[0].mxu0
        %v899 = vadd.f32 %v706, %v898
        %900 = vmatprep.mubr.bf16.mxu0 %v380
        %901 = vmatmul.mubr.bf16.gmra.mrb[0].mxu0 %v379
        %v902 = vpop.f32.mrb[0].mxu0
        %v903 = vadd.f32 %v710, %v902
        %v904 = vpop.f32.mrb[0].mxu0
        %v905 = vadd.f32 %v712, %v904
        %v906 = vpop.f32.mrb[0].mxu0
        %v907 = vadd.f32 %v714, %v906
        %v908 = vpop.f32.mrb[0].mxu0
        %v909 = vadd.f32 %v716, %v908
        %910 = vmatprep.mubr.bf16.mxu0 %v384
        %911 = vmatmul.mubr.bf16.gmra.mrb[0].mxu0 %v383
        %v912 = vpop.f32.mrb[0].mxu0
        %v913 = vadd.f32 %v720, %v912
        %v914 = vpop.f32.mrb[0].mxu0
        %v915 = vadd.f32 %v722, %v914
        %v916 = vpop.f32.mrb[0].mxu0
        %v917 = vadd.f32 %v724, %v916
        %v918 = vpop.f32.mrb[0].mxu0
        %v919 = vadd.f32 %v726, %v918
        %920 = vmatprep.mubr.bf16.mxu0 %v388
        %921 = vmatmul.mubr.bf16.gmra.mrb[0].mxu0 %v387
        %v922 = vpop.f32.mrb[0].mxu0
        %v923 = vadd.f32 %v730, %v922
        %v924 = vpop.f32.mrb[0].mxu0
        %v925 = vadd.f32 %v732, %v924
        %v926 = vpop.f32.mrb[0].mxu0
        %v927 = vadd.f32 %v734, %v926
        %v928 = vpop.f32.mrb[0].mxu0
        %v929 = vadd.f32 %v736, %v928
        %930 = vmatprep.mubr.bf16.mxu0 %v392
        %931 = vmatmul.mubr.bf16.gmra.mrb[0].mxu0 %v391
        %v932 = vpop.f32.mrb[0].mxu0
        %v933 = vadd.f32 %v740, %v932
        %v934 = vpop.f32.mrb[0].mxu0
        %v935 = vadd.f32 %v742, %v934
        %v936 = vpop.f32.mrb[0].mxu0
        %v937 = vadd.f32 %v744, %v936
        %v938 = vpop.f32.mrb[0].mxu0
        %v939 = vadd.f32 %v746, %v938
        %940 = vmatprep.mubr.bf16.mxu0 %v396
        %941 = vmatmul.mubr.bf16.gmra.mrb[0].mxu0 %v395
        %v942 = vpop.f32.mrb[0].mxu0
        %v943 = vadd.f32 %v750, %v942
        %v944 = vpop.f32.mrb[0].mxu0
        %v945 = vadd.f32 %v752, %v944
        %v946 = vpop.f32.mrb[0].mxu0
        %v947 = vadd.f32 %v754, %v946
        %v948 = vpop.f32.mrb[0].mxu0
        %v949 = vadd.f32 %v756, %v948
        %950 = vmatprep.mubr.bf16.mxu0 %v400
        %951 = vmatmul.mubr.bf16.gmra.mrb[0].mxu0 %v399
        %v952 = vpop.f32.mrb[0].mxu0
        %v953 = vadd.f32 %v760, %v952
        %v954 = vpop.f32.mrb[0].mxu0
        %v955 = vadd.f32 %v762, %v954
        %v956 = vpop.f32.mrb[0].mxu0
        %v957 = vadd.f32 %v764, %v956
        %v958 = vpop.f32.mrb[0].mxu0
        %v959 = vadd.f32 %v766, %v958
        %960 = vmatprep.mubr.bf16.mxu0 %v404
        %961 = vmatmul.mubr.bf16.gmra.mrb[0].mxu0 %v403
        %v962 = vpop.f32.mrb[0].mxu0
        %v963 = vadd.f32 %v770, %v962
        %v964 = vpop.f32.mrb[0].mxu0
        %v965 = vadd.f32 %v772, %v964
        %v966 = vpop.f32.mrb[0].mxu0
        %v967 = vadd.f32 %v774, %v966
        %v968 = vpop.f32.mrb[0].mxu0
        %v969 = vadd.f32 %v776, %v968
        %970 = vmatprep.mubr.bf16.mxu0 %v408
        %971 = vmatmul.mubr.bf16.gmra.mrb[0].mxu0 %v407
        %v972 = vpop.f32.mrb[0].mxu0
        %v973 = vadd.f32 %v780, %v972
        %v974 = vpop.f32.mrb[0].mxu0
        %v975 = vadd.f32 %v782, %v974
        %v976 = vpop.f32.mrb[0].mxu0
        %v977 = vadd.f32 %v784, %v976
        %v978 = vpop.f32.mrb[0].mxu0
        %v979 = vadd.f32 %v786, %v978
        %980 = vmatprep.mubr.bf16.mxu0 %v412
        %981 = vmatmul.mubr.bf16.gmra.mrb[0].mxu0 %v411
        %v982 = vpop.f32.mrb[0].mxu0
        %v983 = vadd.f32 %v790, %v982
        %v984 = vpop.f32.mrb[0].mxu0
        %v985 = vadd.f32 %v792, %v984
        %v986 = vpop.f32.mrb[0].mxu0
        %v987 = vadd.f32 %v794, %v986
        %v988 = vpop.f32.mrb[0].mxu0
        %v989 = vadd.f32 %v796, %v988
        %990 = vdwg.mxu0
        %v991 = vpack.c.bf16 %v837, %v833
        %v992 = vpack.c.bf16 %v839, %v835
        %v993 = vpack.c.bf16 %v847, %v843
        %v994 = vpack.c.bf16 %v849, %v845
        %v995 = vpack.c.bf16 %v857, %v853
        %v996 = vpack.c.bf16 %v859, %v855
        %v997 = vpack.c.bf16 %v867, %v863
        %v998 = vpack.c.bf16 %v869, %v865
        %v999 = vpack.c.bf16 %v877, %v873
        %v1000 = vpack.c.bf16 %v879, %v875
        %v1001 = vpack.c.bf16 %v887, %v883
        %v1002 = vpack.c.bf16 %v889, %v885
        %v1003 = vpack.c.bf16 %v897, %v893
        %v1004 = vpack.c.bf16 %v899, %v895
        %v1005 = vpack.c.bf16 %v907, %v903
        %v1006 = vpack.c.bf16 %v909, %v905
        %v1007 = vpack.c.bf16 %v917, %v913
        %v1008 = vpack.c.bf16 %v919, %v915
        %v1009 = vpack.c.bf16 %v927, %v923
        %v1010 = vpack.c.bf16 %v929, %v925
        %v1011 = vpack.c.bf16 %v937, %v933
        %v1012 = vpack.c.bf16 %v939, %v935
        %v1013 = vpack.c.bf16 %v947, %v943
        %v1014 = vpack.c.bf16 %v949, %v945
        %v1015 = vpack.c.bf16 %v957, %v953
        %v1016 = vpack.c.bf16 %v959, %v955
        %v1017 = vpack.c.bf16 %v967, %v963
        %v1018 = vpack.c.bf16 %v969, %v965
        %v1019 = vpack.c.bf16 %v977, %v973
        %v1020 = vpack.c.bf16 %v979, %v975
        %v1021 = vpack.c.bf16 %v987, %v983
        %v1022 = vpack.c.bf16 %v989, %v985
        %v1055 = vunpack.c.l.b16 %v991
        %v1056 = vunpack.c.l.b16 %v992
        %v1057 = vunpack.c.h.b16 %v991
        %v1058 = vunpack.c.h.b16 %v992
        %v1059 = vunpack.c.l.b16 %v993
        %v1060 = vunpack.c.l.b16 %v994
        %v1061 = vunpack.c.h.b16 %v993
        %v1062 = vunpack.c.h.b16 %v994
        %v1063 = vunpack.c.l.b16 %v995
        %v1064 = vunpack.c.l.b16 %v996
        %v1065 = vunpack.c.h.b16 %v995
        %v1066 = vunpack.c.h.b16 %v996
        %v1067 = vunpack.c.l.b16 %v997
        %v1068 = vunpack.c.l.b16 %v998
        %v1069 = vunpack.c.h.b16 %v997
        %v1070 = vunpack.c.h.b16 %v998
        %v1071 = vunpack.c.l.b16 %v999
        %v1072 = vunpack.c.l.b16 %v1000
        %v1073 = vunpack.c.h.b16 %v999
        %v1074 = vunpack.c.h.b16 %v1000
        %v1075 = vunpack.c.l.b16 %v1001
        %v1076 = vunpack.c.l.b16 %v1002
        %v1077 = vunpack.c.h.b16 %v1001
        %v1078 = vunpack.c.h.b16 %v1002
        %v1079 = vunpack.c.l.b16 %v1003
        %v1080 = vunpack.c.l.b16 %v1004
        %v1081 = vunpack.c.h.b16 %v1003
        %v1082 = vunpack.c.h.b16 %v1004
        %v1083 = vunpack.c.l.b16 %v1005
        %v1084 = vunpack.c.l.b16 %v1006
        %v1085 = vunpack.c.h.b16 %v1005
        %v1086 = vunpack.c.h.b16 %v1006
        %v1087 = vunpack.c.l.b16 %v1007
        %v1088 = vunpack.c.l.b16 %v1008
        %v1089 = vunpack.c.h.b16 %v1007
        %v1090 = vunpack.c.h.b16 %v1008
        %v1091 = vunpack.c.l.b16 %v1009
        %v1092 = vunpack.c.l.b16 %v1010
        %v1093 = vunpack.c.h.b16 %v1009
        %v1094 = vunpack.c.h.b16 %v1010
        %v1095 = vunpack.c.l.b16 %v1011
        %v1096 = vunpack.c.l.b16 %v1012
        %v1097 = vunpack.c.h.b16 %v1011
        %v1098 = vunpack.c.h.b16 %v1012
        %v1099 = vunpack.c.l.b16 %v1013
        %v1100 = vunpack.c.l.b16 %v1014
        %v1101 = vunpack.c.h.b16 %v1013
        %v1102 = vunpack.c.h.b16 %v1014
        %v1103 = vunpack.c.l.b16 %v1015
        %v1104 = vunpack.c.l.b16 %v1016
        %v1105 = vunpack.c.h.b16 %v1015
        %v1106 = vunpack.c.h.b16 %v1016
        %v1107 = vunpack.c.l.b16 %v1017
        %v1108 = vunpack.c.l.b16 %v1018
        %v1109 = vunpack.c.h.b16 %v1017
        %v1110 = vunpack.c.h.b16 %v1018
        %v1111 = vunpack.c.l.b16 %v1019
        %v1112 = vunpack.c.l.b16 %v1020
        %v1113 = vunpack.c.h.b16 %v1019
        %v1114 = vunpack.c.h.b16 %v1020
        %v1115 = vunpack.c.l.b16 %v1021
        %v1116 = vunpack.c.l.b16 %v1022
        %v1117 = vunpack.c.h.b16 %v1021
        %v1118 = vunpack.c.h.b16 %v1022
        %v1119 = vpack.c.b16 %v1056, %v1055
        %v1120 = vpack.c.b16 %v1058, %v1057
        %v1121 = vpack.c.b16 %v1060, %v1059
        %v1122 = vpack.c.b16 %v1062, %v1061
        %v1123 = vpack.c.b16 %v1064, %v1063
        %v1124 = vpack.c.b16 %v1066, %v1065
        %v1125 = vpack.c.b16 %v1068, %v1067
        %v1126 = vpack.c.b16 %v1070, %v1069
        %v1127 = vpack.c.b16 %v1072, %v1071
        %v1128 = vpack.c.b16 %v1074, %v1073
        %v1129 = vpack.c.b16 %v1076, %v1075
        %v1130 = vpack.c.b16 %v1078, %v1077
        %v1131 = vpack.c.b16 %v1080, %v1079
        %v1132 = vpack.c.b16 %v1082, %v1081
        %v1133 = vpack.c.b16 %v1084, %v1083
        %v1134 = vpack.c.b16 %v1086, %v1085
        %v1135 = vpack.c.b16 %v1088, %v1087
        %v1136 = vpack.c.b16 %v1090, %v1089
        %v1137 = vpack.c.b16 %v1092, %v1091
        %v1138 = vpack.c.b16 %v1094, %v1093
        %v1139 = vpack.c.b16 %v1096, %v1095
        %v1140 = vpack.c.b16 %v1098, %v1097
        %v1141 = vpack.c.b16 %v1100, %v1099
        %v1142 = vpack.c.b16 %v1102, %v1101
        %v1143 = vpack.c.b16 %v1104, %v1103
        %v1144 = vpack.c.b16 %v1106, %v1105
        %v1145 = vpack.c.b16 %v1108, %v1107
        %v1146 = vpack.c.b16 %v1110, %v1109
        %v1147 = vpack.c.b16 %v1112, %v1111
        %v1148 = vpack.c.b16 %v1114, %v1113
        %v1149 = vpack.c.b16 %v1116, %v1115
        %v1150 = vpack.c.b16 %v1118, %v1117
        %1183 = vst [vmem:[%s216] sm:$0xff] %v1119
        %1184 = vst [vmem:[%s216 + $0x8] sm:$0xff] %v1120
        %1185 = vst [vmem:[%s216 + $0x10] sm:$0xff] %v1121
        %1186 = vst [vmem:[%s216 + $0x18] sm:$0xff] %v1122
        %1187 = vst [vmem:[%s216 + $0x20] sm:$0xff] %v1123
        %1188 = vst [vmem:[%s216 + $0x28] sm:$0xff] %v1124
        %1189 = vst [vmem:[%s216 + $0x30] sm:$0xff] %v1125
        %1190 = vst [vmem:[%s216 + $0x38] sm:$0xff] %v1126
        %1191 = vst [vmem:[%s216 + $0x40] sm:$0xff] %v1127
        %1192 = vst [vmem:[%s216 + $0x48] sm:$0xff] %v1128
        %1193 = vst [vmem:[%s216 + $0x50] sm:$0xff] %v1129
        %1194 = vst [vmem:[%s216 + $0x58] sm:$0xff] %v1130
        %1195 = vst [vmem:[%s216 + $0x60] sm:$0xff] %v1131
        %1196 = vst [vmem:[%s216 + $0x68] sm:$0xff] %v1132
        %1197 = vst [vmem:[%s216 + $0x70] sm:$0xff] %v1133
        %1198 = vst [vmem:[%s216 + $0x78] sm:$0xff] %v1134
        %1199 = vst [vmem:[%s216 + $0x80] sm:$0xff] %v1135
        %1200 = vst [vmem:[%s216 + $0x88] sm:$0xff] %v1136
        %1201 = vst [vmem:[%s216 + $0x90] sm:$0xff] %v1137
        %1202 = vst [vmem:[%s216 + $0x98] sm:$0xff] %v1138
        %1203 = vst [vmem:[%s216 + $0xa0] sm:$0xff] %v1139
        %1204 = vst [vmem:[%s216 + $0xa8] sm:$0xff] %v1140
        %1205 = vst [vmem:[%s216 + $0xb0] sm:$0xff] %v1141
        %1206 = vst [vmem:[%s216 + $0xb8] sm:$0xff] %v1142
        %1207 = vst [vmem:[%s216 + $0xc0] sm:$0xff] %v1143
        %1208 = vst [vmem:[%s216 + $0xc8] sm:$0xff] %v1144
        %1209 = vst [vmem:[%s216 + $0xd0] sm:$0xff] %v1145
        %1210 = vst [vmem:[%s216 + $0xd8] sm:$0xff] %v1146
        %1211 = vst [vmem:[%s216 + $0xe0] sm:$0xff] %v1147
        %1212 = vst [vmem:[%s216 + $0xe8] sm:$0xff] %v1148
        %1213 = vst [vmem:[%s216 + $0xf0] sm:$0xff] %v1149
        %1214 = vst [vmem:[%s216 + $0xf8] sm:$0xff] %v1150
        %s1215 = sand.u32 %s96, 1
        %s1216 = scalar_lea.sflag [#allocation4], %s1215
        %s1217 = sand.u32 %s96, 1
        %s1218 = smul.addr %s1217, 256
        %s1219 = scalar_lea.vmem [#allocation7], %s1218
        // Predicated region
        $region37: #{tpu_custom_call.1} parent=27 // pred_check
          %p1220 = pneg %p106
        $region38: #{tpu_custom_call.1} parent=27 // pred_check_branch
          %1222 = sbr.rel (%p1220) target = $region40
        $region39: #{tpu_custom_call.1} parent=27 // pred_region
          %s1223 = smul.u32 32, %s26
          %s1224 = smul.u32 2, %s27
          %s1226 = ssub.s32 4096, 4096
          %1227 = vsyncadd %s1216, %s1226
          %s1228 = smul.addr %s1223, 8
          %s1229 = sadd.s32 %s1224, %s1228
          %s1230 = smul.addr %s1229, 64
          %s1231 = scalar_lea.hbm %s2, %s1230
          %s1232 = sshll.u32 %s1219, 4
          %s1233 = int_to_ptr.vmem [resolvable:$true] %s1232
          %1238 = dma.vmem_to_hbm [thread:$0]  %s1233, 4096, %s1231, %s1216, 128, 512, 8
        $region40: #{tpu_custom_call.1} parent=27 // pred_fallthru
          _
      $region28: #{tpu_custom_call.1} parent=5 // pred_fallthru
        _
      %p1239 = scmp.le.s32.totalorder 2, %s17
      // Predicated region
      $region41: #{tpu_custom_call.1} parent=5 // pred_check
        %p1240 = pneg %p1239
      $region42: #{tpu_custom_call.1} parent=5 // pred_check_branch
        %1242 = sbr.rel (%p1240) target = $region44
      $region43: #{tpu_custom_call.1} parent=5 // pred_region
        %s1243 = ssub.s32 %s17, 2
        // Predicated region
        $region45: #{tpu_custom_call.1} parent=43 // pred_check
          %p1244 = pneg %p112
        $region46: #{tpu_custom_call.1} parent=43 // pred_check_branch
          %1246 = sbr.rel (%p1244) target = $region48
        $region47: #{tpu_custom_call.1} parent=43 // pred_region
          %s1247 = sand.u32 %s97, 1
          %s1248 = scalar_lea.sflag [#allocation4], %s1247
          %s1249 = sand.u32 %s97, 1
          %s1250 = smul.addr %s1249, 256
          %s1251 = scalar_lea.vmem [#allocation7], %s1250
          %1252 = dma.done %s1248, 4096
        $region48: #{tpu_custom_call.1} parent=43 // pred_fallthru
          _
      $region44: #{tpu_custom_call.1} parent=5 // pred_fallthru
        _
    $region6: #{tpu_custom_call.1} parent=1 // loop_footer
      %s21 = sadd.s32 1, %s17
    $region7: #{tpu_custom_call.1} parent=1 // loop_footer_branch
      %16 = sbr.rel target = $region3
    $region8: #{tpu_custom_call.1} parent=1 // loop_exit
      _
    %1253 = vsyncpa [#allocation3], 1
    %s1254 = scalar_lea.sflag [#allocation3], 1
    %1255 = vsyncpa %s1254, 1
    %1256 = vsyncpa [#allocation6], 1
    %s1257 = scalar_lea.sflag [#allocation6], 1
    %1258 = vsyncpa %s1257, 1
    %1259 = vsyncpa [#allocation4], 1
    %s1260 = scalar_lea.sflag [#allocation4], 1
    %1261 = vsyncpa %s1260, 1

</llo_original>
